<compile_context>
chip_gen: v6e
topology: v6e:2x2x1
jax: 0.10.0
libtpu: 0.0.40
codegen_flags: <defaults>
</compile_context>

<pallas_src>
import jax
import jax.numpy as jnp
from jax.experimental import pallas as pl
from jax.experimental.pallas import tpu as pltpu


def _round_up(a, b):
    return (a + b - 1) // b * b


# ---------------------------------------------------------------------------
# Pallas kernel: fused (x @ w_eff) + bias + relu, streamed over D tiles
# ---------------------------------------------------------------------------
def matvec_relu_kernel(x_ref, w_ref, b_ref, o_ref, acc_ref):
    # x_ref:   (TN, TD)  batch-tile x D-tile of the flattened input
    # w_ref:   (1, TD)   folded input-domain weight (already includes the *6)
    # b_ref:   (1,) SMEM folded scalar bias (includes *6, +3 and conv bias)
    # o_ref:   (TN, 1)   per-image output
    # acc_ref: (TN, TD)  lane-partial accumulator (VMEM scratch)
    d = pl.program_id(1)

    @pl.when(d == 0)
    def _init():
        acc_ref[...] = jnp.zeros_like(acc_ref)

    # Pure VPU work per step: one multiply-add, no MXU, no cross-lane traffic.
    acc_ref[...] += x_ref[...] * w_ref[...]

    @pl.when(d == pl.num_programs(1) - 1)
    def _finalize():
        s = jnp.sum(acc_ref[...], axis=1, keepdims=True)   # single XLU reduce
        o_ref[...] = jnp.maximum(s + b_ref[0], 0.0)


# ---------------------------------------------------------------------------
# Wrapper around pallas_call: batch/D tiling, zero-padding to tile multiples
# ---------------------------------------------------------------------------
def fused_matvec_relu(x_flat, w_row, bias, *, tile_d=512):
    """out[n] = relu(sum_d x_flat[n, d] * w_row[0, d] + bias[0]); shape (N, 1)."""
    N, D = x_flat.shape

    # Batch tiling: small batches stay in one tile (block dim == full dim is
    # allowed); large batches tile by 128 rows and pad to a multiple.
    if N <= 128:
        tn, n_pad = N, N
    else:
        tn = 128
        n_pad = _round_up(N, tn)

    # D tiling: 128-multiple lane tiles so each step is a clean (8,128) block.
    td = min(tile_d, _round_up(D, 128))
    d_pad = _round_up(D, td)

    # Zero-pad (exact: zero lanes contribute nothing; padded batch rows are
    # sliced off below).  No pad is emitted when shapes already align.
    if (n_pad, d_pad) != (N, D):
        x_flat = jnp.pad(x_flat, ((0, n_pad - N), (0, d_pad - D)))
    if d_pad != D:
        w_row = jnp.pad(w_row, ((0, 0), (0, d_pad - D)))

    grid = (n_pad // tn, d_pad // td)
    out = pl.pallas_call(
        matvec_relu_kernel,
        out_shape=jax.ShapeDtypeStruct((n_pad, 1), jnp.float32),
        grid=grid,
        in_specs=[
            pl.BlockSpec((tn, td), lambda n, d: (n, d)),
            pl.BlockSpec((1, td), lambda n, d: (0, d)),
            pl.BlockSpec(memory_space=pltpu.MemorySpace.SMEM),   # scalar bias
        ],
        out_specs=pl.BlockSpec((tn, 1), lambda n, d: (n, 0)),
        scratch_shapes=[pltpu.VMEM((tn, td), jnp.float32)],
        compiler_params=pltpu.CompilerParams(
            dimension_semantics=("parallel", "arbitrary"),
        ),
    )(x_flat, w_row, bias)
    return out[:N]


# ---------------------------------------------------------------------------
# Forward pass: trace-time weight folding only (all per-x work is in-kernel)
# ---------------------------------------------------------------------------
@jax.jit
def model_forward(x, conv_w, conv_b, fc_w, fc_b):
    N, C, H, W = x.shape
    Cout, _, KH, KW = conv_w.shape
    stride, pad = 2, 4
    OH = (H + 2 * pad - KH) // stride + 1
    OW = (W + 2 * pad - KW) // stride + 1
    F = Cout * OH * OW
    assert fc_w.shape == (1, F), (
        "fc sized from the actual conv output; see TODO(synk) at top")

    # fc weight viewed over the conv output image (torch flatten(1) order).
    g_img = fc_w.reshape(Cout, OH, OW)

    # Exact input-domain fold of conv∘fc, valid for any stride/pad/kernel:
    # W_eff = Conv^T(g) via the vjp of the (linear, bias-free) convolution.
    def conv_lin(xi):
        return jax.lax.conv_general_dilated(
            xi, conv_w, window_strides=(stride, stride),
            padding=((pad, pad), (pad, pad)),
            dimension_numbers=("NCHW", "OIHW", "NCHW"))

    _, conv_vjp = jax.vjp(conv_lin, jnp.zeros((1, C, H, W), x.dtype))
    (w_eff,) = conv_vjp(g_img[None].astype(x.dtype))          # (1, C, H, W)

    # Conv-bias contribution through the fc layer is a per-image constant.
    bias_lin = fc_b[0] + jnp.sum(g_img * conv_b[:, None, None])
    # Tail fold: relu(v + b + 3) * 6 == relu(6*v + 6*(b + 3))   (6 > 0).
    w_row = (6.0 * w_eff).reshape(1, C * H * W)
    bias = (6.0 * (bias_lin + 3.0)).reshape(1)

    x_flat = x.reshape(N, C * H * W)      # native NCHW order; no transpose
    return fused_matvec_relu(x_flat, w_row, bias)


# ---------------------------------------------------------------------------
if __name__ == "__main__":
    key = jax.random.PRNGKey(0)
    k_x, k_cw, k_cb, k_fw, k_fb = jax.random.split(key, 5)

    # Module's spec input is (1, 3, 28, 28); use batch=2 to exercise batching.
    N, C, H, W = 2, 3, 28, 28
    Cout, KH, KW = 6, 2, 2
    stride, pad = 2, 4
    OH = (H + 2 * pad - KH) // stride + 1
    OW = (W + 2 * pad - KW) // stride + 1
    F = Cout * OH * OW                      # actual flattened features (1944)

    x = jax.random.normal(k_x, (N, C, H, W), dtype=jnp.float32)
    conv_w = 0.1 * jax.random.normal(k_cw, (Cout, C, KH, KW), dtype=jnp.float32)
    conv_b = 0.1 * jax.random.normal(k_cb, (Cout,), dtype=jnp.float32)
    fc_w = 0.05 * jax.random.normal(k_fw, (1, F), dtype=jnp.float32)
    fc_b = 0.05 * jax.random.normal(k_fb, (1,), dtype=jnp.float32)

    out = model_forward(x, conv_w, conv_b, fc_w, fc_b)
    jax.block_until_ready(out)

    # Sanity check against a plain-JAX reference of the original forward.
    ref_conv = jax.lax.conv_general_dilated(
        x, conv_w, window_strides=(stride, stride),
        padding=((pad, pad), (pad, pad)),
        dimension_numbers=("NCHW", "OIHW", "NCHW"),
    ) + conv_b[None, :, None, None]
    ref = jnp.maximum(ref_conv.reshape(N, -1) @ fc_w.T + fc_b + 3.0, 0.0) * 6.0

    assert out.shape == ref.shape, (out.shape, ref.shape)
    assert jnp.allclose(out, ref, atol=2e-3, rtol=2e-3), float(
        jnp.max(jnp.abs(out - ref)))

    print("KERNEL_OK")
</pallas_src>

<mosaic_0001>
module attributes {stable_mosaic.version = 11 : i64} {
  func.func @matvec_relu_kernel(%arg0: i32, %arg1: i32, %arg2: memref<2x512xf32, #tpu.memory_space<vmem>>, %arg3: memref<1x512xf32, #tpu.memory_space<vmem>>, %arg4: memref<1xf32, #tpu.memory_space<smem>>, %arg5: memref<2x1xf32, #tpu.memory_space<vmem>>, %arg6: memref<2x512xf32, #tpu.memory_space<vmem>>) attributes {dimension_semantics = [#tpu.dimension_semantics<parallel>, #tpu.dimension_semantics<arbitrary>], iteration_bounds = array<i64: 1, 5>, scalar_prefetch = 0 : i64, scratch_operands = 1 : i64, tpu.core_type = #tpu.core_type<tc>, window_params = [{transform_indices = @transform_0, window_bounds = array<i64: 2, 512>}, {transform_indices = @transform_1, window_bounds = array<i64: 1, 512>}, {transform_indices = @transform_2, window_bounds = array<i64: 1>}, {transform_indices = @transform_3, window_bounds = array<i64: 2, 1>}]} {
    %c0_i32 = arith.constant 0 : i32
    %0 = arith.cmpi eq, %arg1, %c0_i32 : i32
    %1 = arith.extui %0 : i1 to i32
    %c0_i32_0 = arith.constant 0 : i32
    %2 = arith.cmpi ne, %1, %c0_i32_0 : i32
    scf.if %2 {
      %cst = arith.constant 0.000000e+00 : f32
      %13 = vector.broadcast %cst : f32 to vector<2x512xf32>
      %c0_9 = arith.constant 0 : index
      %c0_10 = arith.constant 0 : index
      %14 = vector.load %arg6[%c0_9, %c0_10] : memref<2x512xf32, #tpu.memory_space<vmem>>, vector<2x512xf32>
      tpu.vector_store %arg6[%c0_9, %c0_10], %13 {strides = array<i32>} : memref<2x512xf32, #tpu.memory_space<vmem>>, vector<2x512xf32>,
    } else {
    }
    %c0 = arith.constant 0 : index
    %c0_1 = arith.constant 0 : index
    %3 = vector.load %arg6[%c0, %c0_1] : memref<2x512xf32, #tpu.memory_space<vmem>>, vector<2x512xf32>
    %c0_2 = arith.constant 0 : index
    %c0_3 = arith.constant 0 : index
    %4 = vector.load %arg2[%c0_2, %c0_3] : memref<2x512xf32, #tpu.memory_space<vmem>>, vector<2x512xf32>
    %c0_4 = arith.constant 0 : index
    %c0_5 = arith.constant 0 : index
    %5 = vector.load %arg3[%c0_4, %c0_5] : memref<1x512xf32, #tpu.memory_space<vmem>>, vector<1x512xf32>
    %6 = vector.broadcast %5 : vector<1x512xf32> to vector<2x512xf32>
    %7 = arith.mulf %4, %6 : vector<2x512xf32>
    %8 = arith.addf %3, %7 : vector<2x512xf32>
    %c0_6 = arith.constant 0 : index
    %c0_7 = arith.constant 0 : index
    %9 = vector.load %arg6[%c0_6, %c0_7] : memref<2x512xf32, #tpu.memory_space<vmem>>, vector<2x512xf32>
    tpu.vector_store %arg6[%c0_6, %c0_7], %8 {strides = array<i32>} : memref<2x512xf32, #tpu.memory_space<vmem>>, vector<2x512xf32>,
    %c4_i32 = arith.constant 4 : i32
    %10 = arith.cmpi eq, %arg1, %c4_i32 : i32
    %11 = arith.extui %10 : i1 to i32
    %c0_i32_8 = arith.constant 0 : i32
    %12 = arith.cmpi ne, %11, %c0_i32_8 : i32
    scf.if %12 {
      %c0_9 = arith.constant 0 : index
      %c0_10 = arith.constant 0 : index
      %13 = vector.load %arg6[%c0_9, %c0_10] : memref<2x512xf32, #tpu.memory_space<vmem>>, vector<2x512xf32>
      %cst = arith.constant dense<0.000000e+00> : vector<2xf32>
      %14 = vector.multi_reduction <add>, %13, %cst [1] : vector<2x512xf32> to vector<2xf32>
      %15 = vector.shape_cast %14 : vector<2xf32> to vector<2x1xf32>
      %c0_11 = arith.constant 0 : index
      %16 = memref.load %arg4[%c0_11] : memref<1xf32, #tpu.memory_space<smem>>
      %17 = vector.broadcast %16 : f32 to vector<2x1xf32>
      %18 = arith.addf %15, %17 : vector<2x1xf32>
      %cst_12 = arith.constant 0.000000e+00 : f32
      %19 = vector.broadcast %cst_12 : f32 to vector<2x1xf32>
      %20 = arith.maximumf %18, %19 : vector<2x1xf32>
      %c0_13 = arith.constant 0 : index
      %c0_14 = arith.constant 0 : index
      %21 = vector.load %arg5[%c0_13, %c0_14] : memref<2x1xf32, #tpu.memory_space<vmem>>, vector<2x1xf32>
      tpu.vector_store %arg5[%c0_13, %c0_14], %20 {strides = array<i32>} : memref<2x1xf32, #tpu.memory_space<vmem>>, vector<2x1xf32>,
    } else {
    }
    return
  }
  func.func @transform_0(%arg0: i32, %arg1: i32) -> (i32, i32) {
    %c0_i32 = arith.constant 0 : i32
    return %arg0, %arg1 : i32, i32
  }
  func.func @transform_1(%arg0: i32, %arg1: i32) -> (i32, i32) {
    %c0_i32 = arith.constant 0 : i32
    %c0_i32_0 = arith.constant 0 : i32
    return %c0_i32, %arg1 : i32, i32
  }
  func.func @transform_2(%arg0: i32, %arg1: i32) -> i32 {
    %c0_i32 = arith.constant 0 : i32
    %c0_i32_0 = arith.constant 0 : i32
    return %c0_i32 : i32
  }
  func.func @transform_3(%arg0: i32, %arg1: i32) -> (i32, i32) {
    %c0_i32 = arith.constant 0 : i32
    %c0_i32_0 = arith.constant 0 : i32
    return %arg0, %c0_i32 : i32, i32
  }
}

</mosaic_0001>

<llo_original>
// kernel: model_forward.1
$region0: #{model_forward.1}
  #allocation0 [shape = 'u32[]', space=smem, size = 0x4, offset = 0x4, fixed_abs, tag = 'smem constant byte address 0x4 - core index']
  #allocation1 [shape = 'u32[144,128]{1,0:T(1,128)}', space=vmem, size = 0x12000, scoped, tag = 'internal scratch']
  #allocation2 [shape = 'f32[2,512]{1,0:T(2,128)}', space=vmem, size = 0x1000, scoped, tag = 'scratch operand']
  #allocation3 [shape = 'f32[1]{0:T(128)S(6)}', space=smem, size = 0x200, scoped, tag = 'scoped memory for model_forward.1']
  %s0 = inlined_call_operand.vmem [shape: f32[2,2560], index: 0, kind: input, shape index: {}]
  %s1 = inlined_call_operand.vmem [shape: f32[1,2560], index: 1, kind: input, shape index: {}]
  %s2 = inlined_call_operand.<no memory space> [shape: f32[1], index: 2, kind: input, shape index: {}]
  %s3 = inlined_call_operand.vmem [shape: f32[2,1], index: 3, kind: output, shape index: {}]
  %s4 = sld [smem:[#allocation0]]
  $region53: #{model_forward.1} parent=0
    _
  %s6 = ssub.s32 1, %s4
  %s7 = scalar_select 0, %s6, %s4
  %8 = sst [smem:[#allocation3]] %s2
  loop: start=0, step=1, limit=7
  $region2: #{model_forward.1} parent=0 // loop_pre_header
    _
  $region3: #{model_forward.1} parent=0 // loop_header
    %s10 = sphi 0, %s14
    %p11 = scmp.ge.s32.totalorder %s10, 7
    %s17 = sphi 0, %s29
    %s18 = sphi 0, %s25
    %s19 = sphi 0, %s17
    %s20 = sphi 0, %s18
    %s21 = sphi 0, %s19
    %s22 = sphi 0, %s20
    %s34 = sphi 0, %s36
    %s37 = sphi 0, %s34
    %s38 = sphi 0, %s37
    %s54 = sphi 0, %s38
    %s60 = sphi 0, %s62
    %s63 = sphi 0, %s60
    %s64 = sphi 0, %s63
    %s80 = sphi 0, %s64
    %s84 = sphi 0, %s84
    %s86 = sphi 0, %s84
    %s87 = sphi 0, %s86
    %s101 = sphi 0, %s87
    %s107 = sphi 0, %s109
    %s110 = sphi 0, %s107
    %s111 = sphi 0, %s110
    %s127 = sphi 0, %s111
  $region4: #{model_forward.1} parent=0 // loop_header_branch
    %13 = sbr.rel (%p11) target = $region8
  $region5: #{model_forward.1} parent=0 // loop_body
    %s15 = ssub.s32 %s10, 1
    %s16 = ssub.s32 %s10, 2
    %s23 = sadd.s32 1, %s18
    %p24 = scmp.ge.s32.totalorder %s23, 5
    %s25 = scalar_select %p24, 0, %s23
    %s26 = sadd.s32 1, %s17
    %s27 = scalar_select %p24, %s26, %s17
    %p28 = scmp.ge.s32.totalorder %s27, 1
    %s29 = scalar_select %p28, 0, %s27
    %s30 = ssub.s32 %s17, %s29
    %s31 = ssub.s32 %s18, %s25
    %s32 = sor.u32 %s30, %s31
    %p33 = scmp.eq.s32.totalorder %s32, 0
    %s35 = sadd.s32 %s34, 1
    %s36 = scalar_select %p33, %s34, %s35
    %p39 = pneg %p33
    %p40 = scmp.eq.s32.totalorder %s10, 4
    %p41 = por %p39, %p40
    %p42 = scmp.ne.s32.totalorder %s34, %s37
    %p43 = scmp.eq.s32.totalorder %s10, 0
    %p44 = por %p42, %p43
    %p45 = scmp.ne.s32.totalorder %s34, %s37
    %p46 = scmp.eq.s32.totalorder %s15, 4
    %p47 = por %p45, %p46
    %p48 = scmp.ne.s32.totalorder %s37, %s38
    %p49 = scmp.eq.s32.totalorder %s15, 0
    %p50 = por %p48, %p49
    %p51 = scmp.ne.s32.totalorder %s37, %s38
    %p52 = scmp.eq.s32.totalorder %s16, 4
    %p53 = por %p51, %p52
    %p55 = scmp.ne.s32.totalorder %s38, %s54
    %p56 = scmp.eq.s32.totalorder %s16, 0
    %p57 = por %p55, %p56
    %s58 = ssub.s32 %s18, %s25
    %p59 = scmp.eq.s32.totalorder %s58, 0
    %s61 = sadd.s32 %s60, 1
    %s62 = scalar_select %p59, %s60, %s61
    %p65 = pneg %p59
    %p66 = scmp.eq.s32.totalorder %s10, 4
    %p67 = por %p65, %p66
    %p68 = scmp.ne.s32.totalorder %s60, %s63
    %p69 = scmp.eq.s32.totalorder %s10, 0
    %p70 = por %p68, %p69
    %p71 = scmp.ne.s32.totalorder %s60, %s63
    %p72 = scmp.eq.s32.totalorder %s15, 4
    %p73 = por %p71, %p72
    %p74 = scmp.ne.s32.totalorder %s63, %s64
    %p75 = scmp.eq.s32.totalorder %s15, 0
    %p76 = por %p74, %p75
    %p77 = scmp.ne.s32.totalorder %s63, %s64
    %p78 = scmp.eq.s32.totalorder %s16, 4
    %p79 = por %p77, %p78
    %p81 = scmp.ne.s32.totalorder %s64, %s80
    %p82 = scmp.eq.s32.totalorder %s16, 0
    %p83 = por %p81, %p82
    %s85 = sadd.s32 %s84, 1
    %p88 = scmp.eq.s32.totalorder %s10, 4
    %p89 = scmp.ne.s32.totalorder %s84, %s86
    %p90 = scmp.eq.s32.totalorder %s10, 0
    %p91 = por %p89, %p90
    %p92 = scmp.ne.s32.totalorder %s84, %s86
    %p93 = scmp.eq.s32.totalorder %s15, 4
    %p94 = por %p92, %p93
    %p95 = scmp.ne.s32.totalorder %s86, %s87
    %p96 = scmp.eq.s32.totalorder %s15, 0
    %p97 = por %p95, %p96
    %p98 = scmp.ne.s32.totalorder %s86, %s87
    %p99 = scmp.eq.s32.totalorder %s16, 4
    %p100 = por %p98, %p99
    %p102 = scmp.ne.s32.totalorder %s87, %s101
    %p103 = scmp.eq.s32.totalorder %s16, 0
    %p104 = por %p102, %p103
    %s105 = ssub.s32 %s17, %s29
    %p106 = scmp.eq.s32.totalorder %s105, 0
    %s108 = sadd.s32 %s107, 1
    %s109 = scalar_select %p106, %s107, %s108
    %p112 = pneg %p106
    %p113 = scmp.eq.s32.totalorder %s10, 4
    %p114 = por %p112, %p113
    %p115 = scmp.ne.s32.totalorder %s107, %s110
    %p116 = scmp.eq.s32.totalorder %s10, 0
    %p117 = por %p115, %p116
    %p118 = scmp.ne.s32.totalorder %s107, %s110
    %p119 = scmp.eq.s32.totalorder %s15, 4
    %p120 = por %p118, %p119
    %p121 = scmp.ne.s32.totalorder %s110, %s111
    %p122 = scmp.eq.s32.totalorder %s15, 0
    %p123 = por %p121, %p122
    %p124 = scmp.ne.s32.totalorder %s110, %s111
    %p125 = scmp.eq.s32.totalorder %s16, 4
    %p126 = por %p124, %p125
    %p128 = scmp.ne.s32.totalorder %s111, %s127
    %p129 = scmp.eq.s32.totalorder %s16, 0
    %p130 = por %p128, %p129
    %p131 = scmp.le.s32.totalorder 1, %s10
    %p132 = scmp.lt.s32.totalorder %s10, 6
    %p133 = pnand %p131, %p132
    %p134 = pneg %p133
    // Predicated region
    $region9: #{model_forward.1} parent=5 // pred_check
      _
    $region10: #{model_forward.1} parent=5 // pred_check_branch
      %136 = sbr.rel (%p133) target = $region12
    $region11: #{model_forward.1} parent=5 // pred_region
      %s137 = ssub.s32 %s10, 1
      // Predicated region
      $region13: #{model_forward.1} parent=11 // pred_check
        %p138 = pneg %p97
      $region14: #{model_forward.1} parent=11 // pred_check_branch
        %140 = sbr.rel (%p138) target = $region16
      $region15: #{model_forward.1} parent=11 // pred_region
        _
      $region16: #{model_forward.1} parent=11 // pred_fallthru
        _
    $region12: #{model_forward.1} parent=5 // pred_fallthru
      _
    %p141 = scmp.lt.s32.totalorder %s10, 5
    // Predicated region
    $region17: #{model_forward.1} parent=5 // pred_check
      %p142 = pneg %p141
    $region18: #{model_forward.1} parent=5 // pred_check_branch
      %144 = sbr.rel (%p142) target = $region20
    $region19: #{model_forward.1} parent=5 // pred_region
      // Predicated region
      $region21: #{model_forward.1} parent=19 // pred_check
        %p145 = pneg %p44
      $region22: #{model_forward.1} parent=19 // pred_check_branch
        %147 = sbr.rel (%p145) target = $region24
      $region23: #{model_forward.1} parent=19 // pred_region
        %s148 = smul.u32 4, %s18
        %p149 = scmp.lt.s32.totalorder %s17, 0
        %s150 = scalar_select %p149, %s17, 0
        %p151 = scmp.lt.s32.totalorder %s148, 19
        %s152 = scalar_select %p151, %s148, 19
        %s153 = smul.addr %s150, 20
        %s154 = sadd.s32 %s152, %s153
        %s155 = smul.addr %s154, 2
        %s156 = scalar_lea.vmem %s0, %s155
        %s157 = smul.u32 4, %s18
      $region24: #{model_forward.1} parent=19 // pred_fallthru
        _
      // Predicated region
      $region25: #{model_forward.1} parent=19 // pred_check
        %p158 = pneg %p70
      $region26: #{model_forward.1} parent=19 // pred_check_branch
        %160 = sbr.rel (%p158) target = $region28
      $region27: #{model_forward.1} parent=19 // pred_region
        %s161 = smul.u32 4, %s18
        %p162 = scmp.lt.s32.totalorder %s161, 19
        %s163 = scalar_select %p162, %s161, 19
        %s164 = scalar_lea.vmem %s1, %s163
        %s165 = smul.u32 4, %s18
      $region28: #{model_forward.1} parent=19 // pred_fallthru
        _
    $region20: #{model_forward.1} parent=5 // pred_fallthru
      _
    %p166 = scmp.le.s32.totalorder 1, %s10
    %p167 = scmp.lt.s32.totalorder %s10, 6
    %p168 = pnand %p166, %p167
    %p169 = pneg %p168
    // Predicated region
    $region29: #{model_forward.1} parent=5 // pred_check
      _
    $region30: #{model_forward.1} parent=5 // pred_check_branch
      %171 = sbr.rel (%p168) target = $region32
    $region31: #{model_forward.1} parent=5 // pred_region
      %s172 = ssub.s32 %s10, 1
      %s173 = smul.u32 4, %s20
      %p174 = scmp.lt.s32.totalorder %s19, 0
      %s175 = scalar_select %p174, %s19, 0
      %p176 = scmp.lt.s32.totalorder %s173, 19
      %s177 = scalar_select %p176, %s173, 19
      %s178 = smul.addr %s175, 20
      %s179 = sadd.s32 %s177, %s178
      %s180 = smul.addr %s179, 2
      %s181 = scalar_lea.vmem %s0, %s180
      %p182 = pneg %p50
      %p183 = pneg %p47
      %s184 = smul.u32 4, %s20
      %p185 = scmp.lt.s32.totalorder %s184, 19
      %s186 = scalar_select %p185, %s184, 19
      %s187 = scalar_lea.vmem %s1, %s186
      %p188 = pneg %p76
      %p189 = pneg %p73
      %p190 = pneg %p97
      %p191 = pneg %p94
      %p192 = pneg %p123
      %p193 = pneg %p120
      %p194 = scmp.lt.s32.totalorder %s19, 0
      %s195 = scalar_select %p194, %s19, 0
      %s196 = smul.addr %s195, 2
      %s197 = scalar_lea.vmem %s3, %s196
      %s198 = smul.u32 4, %s20
      %p199 = scmp.lt.s32.totalorder %s19, 0
      %s200 = scalar_select %p199, %s19, 0
      %p201 = scmp.lt.s32.totalorder %s198, 19
      %s202 = scalar_select %p201, %s198, 19
      %s203 = smul.addr %s200, 20
      %s204 = sadd.s32 %s202, %s203
      %s205 = smul.addr %s204, 2
      %s206 = scalar_lea.vmem %s0, %s205
      %s207 = smul.u32 4, %s20
      %s208 = smul.u32 4, %s20
      %p209 = scmp.lt.s32.totalorder %s208, 19
      %s210 = scalar_select %p209, %s208, 19
      %s211 = scalar_lea.vmem %s1, %s210
      %s212 = smul.u32 4, %s20
      %p213 = scmp.lt.s32.totalorder %s19, 0
      %s214 = scalar_select %p213, %s19, 0
      %s215 = smul.addr %s214, 2
      %s216 = scalar_lea.vmem %s3, %s215
      %p217 = scmp.eq.s32.totalorder %s20, 0
      // Predicated region
      $region33: #{model_forward.1} parent=31 // pred_check
        %p218 = pneg %p217
      $region34: #{model_forward.1} parent=31 // pred_check_branch
        %220 = sbr.rel (%p218) target = $region36
      $region35: #{model_forward.1} parent=31 // pred_region
        %221 = vst [vmem:[#allocation2] sm:$0xff] 0.0
      $region36: #{model_forward.1} parent=31 // pred_fallthru
        _
      %v222 = vld [vmem:[#allocation2] sm:$0xff]
      %v223 = vld [vmem:[%s206] sm:$0xff]
      %v224 = vld [vmem:[%s211] sm:$0xf]
      %v226 = vlaneseq
      %v227 = vshrl.u32 %v226, 7
      %v228 = vsub.s32 0, %v227
      %v229 = vrot.slane %v224, %v228
      %v230 = vlaneseq
      %v231 = vshrl.u32 %v230, 7
      %v232 = vsub.s32 1, %v231
      %v233 = vrot.slane %v224, %v232
      %v234 = vlaneseq
      %v235 = vshrl.u32 %v234, 7
      %v236 = vsub.s32 2, %v235
      %v237 = vrot.slane %v224, %v236
      %v238 = vlaneseq
      %v239 = vshrl.u32 %v238, 7
      %v240 = vsub.s32 3, %v239
      %v241 = vrot.slane %v224, %v240
      %v242 = vcombine.low %v229, %v233
      %v243 = vcombine.low %v237, %v241
      %v245 = vunpack.c.l.s4 1983009808
      %v246 = vunpack.c.0.s8 %v245
      %v247 = vlaneseq
      %v248 = vshrl.u32 %v247, 7
      %v249 = vsub.s32 %v246, %v248
      %v250 = vrot.slane %v242, %v249
      %v252 = vunpack.c.l.s4 1983009808
      %v253 = vunpack.c.0.s8 %v252
      %v254 = vlaneseq
      %v255 = vshrl.u32 %v254, 7
      %v256 = vsub.s32 %v253, %v255
      %v257 = vrot.slane %v243, %v256
      %v258 = vcombine.low %v250, %v257
      %v260 = vmul.f32 %v223, %v258
      %v261 = vadd.f32 %v222, %v260
      %262 = vst [vmem:[#allocation2] sm:$0xff] %v261
      %p263 = scmp.eq.s32.totalorder %s20, 4
      // Predicated region
      $region37: #{model_forward.1} parent=31 // pred_check
        %p264 = pneg %p263
      $region38: #{model_forward.1} parent=31 // pred_check_branch
        %266 = sbr.rel (%p264) target = $region40
      $region39: #{model_forward.1} parent=31 // pred_region
        %v267 = vld [vmem:[#allocation2] sm:$0xff]
        %v269 = vcombine.high %v267, %v267
        %v271 = vunpack.c.l.s4 1983009808
        %v272 = vunpack.c.0.s8 %v271
        %v273 = vlaneseq
        %v274 = vshrl.u32 %v273, 7
        %v275 = vsub.s32 %v272, %v274
        %v276 = vrot.slane %v267, %v275
        %v278 = vunpack.c.l.s4 1983009808
        %v279 = vunpack.c.0.s8 %v278
        %v280 = vlaneseq
        %v281 = vshrl.u32 %v280, 7
        %v282 = vsub.s32 %v279, %v281
        %v283 = vrot.slane %v269, %v282
        %v284 = vcombine.high %v276, %v276
        %v285 = vcombine.high %v283, %v283
        %vm290 = vcmask 1041408
        %v291 = vsel %vm290, %v276, 0.0
        %v292 = vsel %vm290, %v284, 0.0
        %v293 = vadd.f32 %v291, %v292
        %v294 = vsel %vm290, %v283, 0.0
        %v295 = vadd.f32 %v293, %v294
        %v296 = vsel %vm290, %v285, 0.0
        %v297 = vadd.f32 %v295, %v296
        %298 = vadd.xlane.f32.xlu0 %v297
        %v299 = vpop.xlane.xlu0 %298
        %s300 = sld [smem:[#allocation3]]
        %v301 = vstv %s300
        %v302 = vadd.f32 %v299, %v301
        %v303 = vmax.f32 %v302, 0.0
        %vm304 = vcmask 1024
        %305 = vst.msk [vmem:[%s216] sm:$0x3] %vm304, %v303
      $region40: #{model_forward.1} parent=31 // pred_fallthru
        _
      %p306 = scmp.lt.s32.totalorder %s19, 0
      %s307 = scalar_select %p306, %s19, 0
      %s308 = smul.addr %s307, 2
      %s309 = scalar_lea.vmem %s3, %s308
      // Predicated region
      $region41: #{model_forward.1} parent=31 // pred_check
        %p310 = pneg %p120
      $region42: #{model_forward.1} parent=31 // pred_check_branch
        %312 = sbr.rel (%p310) target = $region44
      $region43: #{model_forward.1} parent=31 // pred_region
        _
      $region44: #{model_forward.1} parent=31 // pred_fallthru
        _
      // Predicated region
      $region45: #{model_forward.1} parent=31 // pred_check
        %p313 = pneg %p120
      $region46: #{model_forward.1} parent=31 // pred_check_branch
        %315 = sbr.rel (%p313) target = $region48
      $region47: #{model_forward.1} parent=31 // pred_region
        %p316 = scmp.lt.s32.totalorder %s19, 0
        %s317 = scalar_select %p316, %s19, 0
        %s318 = smul.addr %s317, 2
        %s319 = scalar_lea.vmem %s3, %s318
      $region48: #{model_forward.1} parent=31 // pred_fallthru
        _
    $region32: #{model_forward.1} parent=5 // pred_fallthru
      _
    %p320 = scmp.le.s32.totalorder 2, %s10
    // Predicated region
    $region49: #{model_forward.1} parent=5 // pred_check
      %p321 = pneg %p320
    $region50: #{model_forward.1} parent=5 // pred_check_branch
      %323 = sbr.rel (%p321) target = $region52
    $region51: #{model_forward.1} parent=5 // pred_region
      %s324 = ssub.s32 %s10, 2
    $region52: #{model_forward.1} parent=5 // pred_fallthru
      _
  $region6: #{model_forward.1} parent=0 // loop_footer
    %s14 = sadd.s32 1, %s10
  $region7: #{model_forward.1} parent=0 // loop_footer_branch
    %9 = sbr.rel target = $region3
  $region8: #{model_forward.1} parent=0 // loop_exit
    _

</llo_original>
